<compile_context>
chip_gen: v5e
topology: v5e:2x2
jax: 0.10.0
libtpu: 0.0.40
codegen_flags: <defaults>
</compile_context>

<pallas_src>
import math
from functools import partial

import jax
import jax.numpy as jnp
from jax.experimental import pallas as pl
from jax.experimental.pallas import tpu as pltpu


def _self_attention_kernel(x_ref, w_ref, qk_ref, v_ref, *, t, matmul_dtype):
    # x_ref:  (Bb*T, C)   flattened batch-block of inputs (matmul_dtype)
    # w_ref:  (C, 3C)     fused QKV projection weights (Q | K | V along cols)
    # qk_ref: (Bb, T, T)  softmaxed attention weights
    # v_ref:  (Bb, T, C)  attended values
    rows, c = x_ref.shape
    bb = rows // t

    x2d = x_ref[...]                               # (Bb*T, C)
    w = w_ref[...]                                 # (C, 3C)

    # Single wide projection over all Bb*T rows, f32 accumulation on the MXU.
    qkv = jnp.dot(x2d, w, preferred_element_type=jnp.float32)   # (Bb*T, 3C) f32
    qkv = qkv.reshape(bb, t, 3 * c)                              # split batch back out

    # NOTE: lane-aligned only when C % 128 == 0; fine (just relayout copies)
    # for small C as in the demo.
    wq = qkv[..., 0 * c:1 * c]                     # (Bb, T, C)
    wk = qkv[..., 1 * c:2 * c]
    wv = qkv[..., 2 * c:3 * c]

    # scores = WQ @ WK^T / sqrt(C); contract last dims directly (no XLU
    # transpose of WK).
    scores = jnp.einsum(
        "btd,bsd->bts",
        wq.astype(matmul_dtype), wk.astype(matmul_dtype),
        preferred_element_type=jnp.float32)        # (Bb, T, T) f32
    scores = scores * (1.0 / math.sqrt(c))

    # Numerically-stabilized softmax over the key dim (f32); reciprocal on the
    # EUP slot.
    scores = scores - jnp.max(scores, axis=-1, keepdims=True)
    e = jnp.exp(scores)
    denom = jnp.sum(e, axis=-1, keepdims=True)
    p = e * pl.reciprocal(denom, approx=True)      # (Bb, T, T) f32

    v = jnp.einsum(
        "bts,bsd->btd",
        p.astype(matmul_dtype), wv.astype(matmul_dtype),
        preferred_element_type=jnp.float32)        # (Bb, T, C) f32

    qk_ref[...] = p.astype(qk_ref.dtype)
    v_ref[...] = v.astype(v_ref.dtype)


def _vmem_limits():
    """(vmem_limit_bytes for CompilerParams, working-set budget for tiling)."""
    cap = None
    get_info = getattr(pltpu, "get_tpu_info", None)
    if get_info is not None:
        try:
            cap = getattr(get_info(), "vmem_capacity_bytes", None)
        except Exception:  # no TPU info available at trace time
            cap = None
    if not cap:
        cap = 64 * 1024 * 1024          # conservative fallback (v7x per-core VMEM)
    limit = min((int(cap) * 3) // 4, 100 * 1024 * 1024)   # scoped compiler limit
    budget = (limit * 5) // 8                              # headroom for pipeline extras
    return int(limit), int(budget)


def _pick_block_b(B, T, C, in_bytes, out_bytes, vmem_budget,
                  min_steps=4, target_rows=1024):
    """Largest divisor of B that keeps >= min(min_steps, B) grid steps, at most
    ~target_rows of (block_b*T) per step, and a working set inside the budget."""
    min_steps = min(min_steps, B)
    best = 1
    for bb in range(1, B + 1):
        if B % bb:
            continue
        if B // bb < min_steps:
            break                       # divisors ascending => steps only shrink
        rows = bb * T
        if rows > max(target_rows, T):
            break
        io = 2 * (rows * C * in_bytes           # x block (double-buffered)
                  + bb * T * T * out_bytes      # qk block
                  + bb * T * C * out_bytes)     # v block
        wgt = 2 * C * 3 * C * in_bytes          # constant weight block (2 bufs)
        scratch = 4 * (rows * 3 * C             # qkv (f32)
                       + 3 * bb * T * T         # scores / exp / p (f32)
                       + bb * T * C)            # v accum (f32)
        if io + wgt + scratch <= vmem_budget:
            best = bb
    return best


def self_attention(x, kernel, *, matmul_dtype=jnp.float32, block_b=None):
    """x: (B, T, C); kernel: (3, C, C)  ->  (QK (B, T, T), V (B, T, C)).

    matmul_dtype=jnp.bfloat16 casts the MXU/DMA operands in the wrapper (f32
    accumulation and f32 softmax are kept) — recommended on v5e/v6e/v7x for
    larger C.
    """
    B, T, C = x.shape
    assert kernel.shape == (3, C, C)
    out_dtype = x.dtype

    # Fuse the three projection matrices column-wise:
    # W_qkv[:, i*C:(i+1)*C] == kernel[i].
    w_qkv = jnp.transpose(kernel, (1, 0, 2)).reshape(C, 3 * C)

    # Cast the matmul operands HERE (halves HBM->VMEM bytes / VMEM footprint
    # on the bf16 path and removes in-kernel casts), flatten batch for the
    # projection — pure layout plumbing.
    x_in = x.astype(matmul_dtype)
    w_in = w_qkv.astype(matmul_dtype)
    x_flat = x_in.reshape(B * T, C)

    vmem_limit, vmem_budget = _vmem_limits()
    in_bytes = jnp.dtype(matmul_dtype).itemsize
    out_bytes = jnp.dtype(out_dtype).itemsize

    if block_b is None:
        block_b = _pick_block_b(B, T, C, in_bytes, out_bytes, vmem_budget)
    assert B % block_b == 0, "block_b must divide B"
    grid = (B // block_b,)

    cost = pl.CostEstimate(
        flops=2 * B * T * C * (3 * C)            # fused QKV projection
              + 2 * B * T * T * C                # QK^T
              + 2 * B * T * T * C,               # PV
        transcendentals=B * T * T,
        bytes_accessed=in_bytes * (B * T * C + 3 * C * C)
                       + out_bytes * (B * T * T + B * T * C),
    )

    grid_spec = pltpu.PrefetchScalarGridSpec(
        num_scalar_prefetch=0,
        grid=grid,
        in_specs=[
            pl.BlockSpec((block_b * T, C), lambda b: (b, 0)),     # flattened x block
            pl.BlockSpec((C, 3 * C), lambda b: (0, 0)),           # fused weights (constant)
        ],
        out_specs=[
            pl.BlockSpec((block_b, T, T), lambda b: (b, 0, 0)),
            pl.BlockSpec((block_b, T, C), lambda b: (b, 0, 0)),
        ],
    )

    return pl.pallas_call(
        partial(_self_attention_kernel, t=T, matmul_dtype=matmul_dtype),
        out_shape=(
            jax.ShapeDtypeStruct((B, T, T), out_dtype),
            jax.ShapeDtypeStruct((B, T, C), out_dtype),
        ),
        grid_spec=grid_spec,
        compiler_params=pltpu.CompilerParams(
            dimension_semantics=("parallel",),
            vmem_limit_bytes=vmem_limit),
        cost_estimate=cost,
    )(x_flat, w_in)


def _reference(x, kernel):
    c = x.shape[-1]
    wq = jnp.einsum("btc,cd->btd", x, kernel[0])
    wk = jnp.einsum("btc,cd->btd", x, kernel[1])
    wv = jnp.einsum("btc,cd->btd", x, kernel[2])
    qk = jnp.einsum("btd,bsd->bts", wq, wk) / math.sqrt(c)
    qk = jax.nn.softmax(qk, axis=-1)
    v = jnp.einsum("bts,bsd->btd", qk, wv)
    return qk, v


if __name__ == "__main__":
    B, T, C = 2, 8, 32   # batch, sequence length, in_channels

    key = jax.random.PRNGKey(0)
    kx, kw = jax.random.split(key)

    x = jax.random.normal(kx, (B, T, C), dtype=jnp.float32)

    # Deterministic parameter init mirroring the module: uniform(-stdv, stdv).
    stdv = 1.0 / math.sqrt(C)
    kernel = jax.random.uniform(
        kw, (3, C, C), dtype=jnp.float32, minval=-stdv, maxval=stdv)

    qk_ref, v_ref = _reference(x, kernel)

    # f32 operand path (approx EUP reciprocal => ~2^-12 relative error).
    qk, v = self_attention(x, kernel)
    jax.block_until_ready((qk, v))
    assert jnp.allclose(qk, qk_ref, atol=2e-3, rtol=2e-3)
    assert jnp.allclose(v, v_ref, atol=2e-3, rtol=2e-3)

    # bf16 operand path (recommended on v5e/v6e/v7x): f32 accumulation + f32
    # softmax; compared at a bf16-appropriate tolerance.
    qk16, v16 = self_attention(x, kernel, matmul_dtype=jnp.bfloat16)
    jax.block_until_ready((qk16, v16))
    assert jnp.allclose(qk16, qk_ref, atol=2e-2, rtol=2e-2)
    assert jnp.allclose(v16, v_ref, atol=2e-2, rtol=2e-2)

    print("KERNEL_OK")
</pallas_src>

<mosaic_0001>
module attributes {stable_mosaic.version = 11 : i64} {
  func.func @_self_attention_kernel(%arg0: i32, %arg1: memref<8x32xf32, #tpu.memory_space<vmem>>, %arg2: memref<32x96xf32, #tpu.memory_space<vmem>>, %arg3: memref<1x8x8xf32, #tpu.memory_space<vmem>>, %arg4: memref<1x8x32xf32, #tpu.memory_space<vmem>>) attributes {dimension_semantics = [#tpu.dimension_semantics<parallel>], iteration_bounds = array<i64: 2>, scalar_prefetch = 0 : i64, scratch_operands = 0 : i64, tpu.core_type = #tpu.core_type<tc>, window_params = [{transform_indices = @transform_0, window_bounds = array<i64: 8, 32>}, {pipeline_mode = #tpu.pipeline_mode<synchronous>, transform_indices = @transform_1, window_bounds = array<i64: 32, 96>}, {transform_indices = @transform_2, window_bounds = array<i64: 1, 8, 8>}, {transform_indices = @transform_3, window_bounds = array<i64: 1, 8, 32>}]} {
    %c0 = arith.constant 0 : index
    %c0_0 = arith.constant 0 : index
    %0 = vector.load %arg1[%c0, %c0_0] : memref<8x32xf32, #tpu.memory_space<vmem>>, vector<8x32xf32>
    %c0_1 = arith.constant 0 : index
    %c0_2 = arith.constant 0 : index
    %1 = vector.load %arg2[%c0_1, %c0_2] : memref<32x96xf32, #tpu.memory_space<vmem>>, vector<32x96xf32>
    %cst = arith.constant dense<0.000000e+00> : vector<8x96xf32>
    %2 = tpu.matmul %0, %1, %cst {dimension_numbers = #tpu.dot_dimension_numbers<[1], [0], [0], [1], [0, 0, 1, 1], [], []>} : vector<8x32xf32>, vector<32x96xf32>, vector<8x96xf32> -> vector<8x96xf32>
    %3 = vector.shape_cast %2 : vector<8x96xf32> to vector<1x8x96xf32>
    %4 = vector.extract_strided_slice %3 {offsets = [0, 0, 0], sizes = [1, 8, 32], strides = [1, 1, 1]} : vector<1x8x96xf32> to vector<1x8x32xf32>
    %5 = vector.extract_strided_slice %3 {offsets = [0, 0, 32], sizes = [1, 8, 32], strides = [1, 1, 1]} : vector<1x8x96xf32> to vector<1x8x32xf32>
    %6 = vector.extract_strided_slice %3 {offsets = [0, 0, 64], sizes = [1, 8, 32], strides = [1, 1, 1]} : vector<1x8x96xf32> to vector<1x8x32xf32>
    "tpu.trace_start"() <{level = 10 : i32, message = "btd,bsd->bts"}> : () -> ()
    %cst_3 = arith.constant dense<0.000000e+00> : vector<1x8x8xf32>
    %7 = tpu.matmul %4, %5, %cst_3 {dimension_numbers = #tpu.dot_dimension_numbers<[2], [2], [1], [1], [0, 0, 0, 1, 1, 1], [0], [0]>} : vector<1x8x32xf32>, vector<1x8x32xf32>, vector<1x8x8xf32> -> vector<1x8x8xf32>
    "tpu.trace_stop"() : () -> ()
    %cst_4 = arith.constant 0.176776692 : f32
    %8 = vector.broadcast %cst_4 : f32 to vector<1x8x8xf32>
    %9 = arith.mulf %7, %8 : vector<1x8x8xf32>
    %cst_5 = arith.constant dense<0xFF800000> : vector<1x8xf32>
    %10 = vector.multi_reduction <maximumf>, %9, %cst_5 [2] : vector<1x8x8xf32> to vector<1x8xf32>
    %11 = vector.shape_cast %10 : vector<1x8xf32> to vector<1x8x1xf32>
    %12 = vector.broadcast %11 : vector<1x8x1xf32> to vector<1x8x8xf32>
    %13 = arith.subf %9, %12 : vector<1x8x8xf32>
    %14 = math.exp %13 : vector<1x8x8xf32>
    %cst_6 = arith.constant dense<0.000000e+00> : vector<1x8xf32>
    %15 = vector.multi_reduction <add>, %14, %cst_6 [2] : vector<1x8x8xf32> to vector<1x8xf32>
    %16 = vector.shape_cast %15 : vector<1x8xf32> to vector<1x8x1xf32>
    %17 = tpu.reciprocal %16 {approx = true} : vector<1x8x1xf32> -> vector<1x8x1xf32>
    %18 = vector.broadcast %17 : vector<1x8x1xf32> to vector<1x8x8xf32>
    %19 = arith.mulf %14, %18 : vector<1x8x8xf32>
    "tpu.trace_start"() <{level = 10 : i32, message = "bts,bsd->btd"}> : () -> ()
    %cst_7 = arith.constant dense<0.000000e+00> : vector<1x8x32xf32>
    %20 = tpu.matmul %19, %6, %cst_7 {dimension_numbers = #tpu.dot_dimension_numbers<[2], [1], [1], [2], [0, 0, 0, 1, 1, 2], [0], [0]>} : vector<1x8x8xf32>, vector<1x8x32xf32>, vector<1x8x32xf32> -> vector<1x8x32xf32>
    "tpu.trace_stop"() : () -> ()
    %c0_8 = arith.constant 0 : index
    %c0_9 = arith.constant 0 : index
    %c0_10 = arith.constant 0 : index
    %21 = vector.load %arg3[%c0_8, %c0_9, %c0_10] : memref<1x8x8xf32, #tpu.memory_space<vmem>>, vector<1x8x8xf32>
    tpu.vector_store %arg3[%c0_8, %c0_9, %c0_10], %19 {strides = array<i32>} : memref<1x8x8xf32, #tpu.memory_space<vmem>>, vector<1x8x8xf32>,
    %c0_11 = arith.constant 0 : index
    %c0_12 = arith.constant 0 : index
    %c0_13 = arith.constant 0 : index
    %22 = vector.load %arg4[%c0_11, %c0_12, %c0_13] : memref<1x8x32xf32, #tpu.memory_space<vmem>>, vector<1x8x32xf32>
    tpu.vector_store %arg4[%c0_11, %c0_12, %c0_13], %20 {strides = array<i32>} : memref<1x8x32xf32, #tpu.memory_space<vmem>>, vector<1x8x32xf32>,
    return
  }
  func.func @transform_0(%arg0: i32) -> (i32, i32) {
    %c0_i32 = arith.constant 0 : i32
    %c0_i32_0 = arith.constant 0 : i32
    return %arg0, %c0_i32 : i32, i32
  }
  func.func @transform_1(%arg0: i32) -> (i32, i32) {
    %c0_i32 = arith.constant 0 : i32
    %c0_i32_0 = arith.constant 0 : i32
    %c0_i32_1 = arith.constant 0 : i32
    return %c0_i32, %c0_i32_0 : i32, i32
  }
  func.func @transform_2(%arg0: i32) -> (i32, i32, i32) {
    %c0_i32 = arith.constant 0 : i32
    %c0_i32_0 = arith.constant 0 : i32
    %c0_i32_1 = arith.constant 0 : i32
    return %arg0, %c0_i32, %c0_i32_0 : i32, i32, i32
  }
  func.func @transform_3(%arg0: i32) -> (i32, i32, i32) {
    %c0_i32 = arith.constant 0 : i32
    %c0_i32_0 = arith.constant 0 : i32
    %c0_i32_1 = arith.constant 0 : i32
    return %arg0, %c0_i32, %c0_i32_0 : i32, i32, i32
  }
}

</mosaic_0001>

<llo_original>
// kernel: tpu_custom_call.1
$region0: #{tpu_custom_call.1}
  #allocation0 [shape = 'u32[]', space=smem, size = 0x4, offset = 0x4, fixed_abs, tag = 'smem constant byte address 0x4 - core index']
  #allocation1 [shape = 'u32[72,128]{1,0:T(1,128)}', space=vmem, size = 0x9000, scoped, tag = 'internal scratch']
  %s0 = inlined_call_operand.hbm [shape: f32[16,32], index: 0, kind: input, shape index: {}]
  %s1 = inlined_call_operand.hbm [shape: f32[32,96], index: 1, kind: input, shape index: {}]
  %s2 = inlined_call_operand.hbm [shape: f32[2,8,8], index: 2, kind: output, shape index: {0}]
  %s3 = inlined_call_operand.hbm [shape: f32[2,8,32], index: 3, kind: output, shape index: {1}]
  %4 = xla_tuple %s2, %s3
  %s5 = sld [smem:[#allocation0]]
  $region57: #{tpu_custom_call.1} parent=0
    _
  %s7 = ssub.s32 1, %s5
  %s8 = scalar_select 0, %s7, %s5
  $region1: #{tpu_custom_call.1} parent=0
    #allocation2 [shape = 'u8[8192]{0}', space=vmem, size = 0x2000, scoped, tag = 'input window, operand 0']
    #allocation3 [shape = 's32[2]{0}', space=sflag, size = 0x8, scoped, tag = 'scoped memory for tpu_custom_call.1']
    #allocation4 [shape = 's32[2]{0}', space=sflag, size = 0x8, scoped, tag = 'scoped memory for tpu_custom_call.1']
    #allocation5 [shape = 'u8[16384]{0}', space=vmem, size = 0x4000, scoped, tag = 'input window, operand 1, single buffered']
    #allocation6 [shape = 's32[1]{0}', space=sflag, size = 0x4, scoped, tag = 'scoped memory for tpu_custom_call.1']
    #allocation7 [shape = 'u8[8192]{0}', space=vmem, size = 0x2000, scoped, tag = 'output window, operand 0']
    #allocation8 [shape = 'u8[8192]{0}', space=vmem, size = 0x2000, scoped, tag = 'output window, operand 1']
    #allocation9 [shape = 's32[2]{0}', space=sflag, size = 0x8, scoped, tag = 'scoped memory for tpu_custom_call.1']
    %9 = vsyncpa [#allocation3], 0
    %s10 = scalar_lea.sflag [#allocation3], 1
    %11 = vsyncpa %s10, 0
    %12 = vsyncpa [#allocation6], 0
    %13 = vsyncpa [#allocation4], 0
    %s14 = scalar_lea.sflag [#allocation4], 1
    %15 = vsyncpa %s14, 0
    %16 = vsyncpa [#allocation9], 0
    %s17 = scalar_lea.sflag [#allocation9], 1
    %18 = vsyncpa %s17, 0
    loop: start=0, step=1, limit=4
    $region2: #{tpu_custom_call.1} parent=1 // loop_pre_header
      _
    $region3: #{tpu_custom_call.1} parent=1 // loop_header
      %s20 = sphi 0, %s24
      %p21 = scmp.ge.s32.totalorder %s20, 4
      %s30 = sphi 0, %s32
      %s33 = sphi 0, %s30
      %s34 = sphi 0, %s33
      %s50 = sphi 0, %s34
      %s54 = sphi 0, %s54
      %s56 = sphi 0, %s54
      %s57 = sphi 0, %s56
      %s71 = sphi 0, %s57
      %s77 = sphi 0, %s79
      %s80 = sphi 0, %s77
      %s81 = sphi 0, %s80
      %s97 = sphi 0, %s81
      %s103 = sphi 0, %s105
      %s106 = sphi 0, %s103
      %s107 = sphi 0, %s106
      %s123 = sphi 0, %s107
    $region4: #{tpu_custom_call.1} parent=1 // loop_header_branch
      %23 = sbr.rel (%p21) target = $region8
    $region5: #{tpu_custom_call.1} parent=1 // loop_body
      %s25 = ssub.s32 %s20, 1
      %s26 = ssub.s32 %s20, 2
      %s27 = sadd.s32 %s20, 1
      %s28 = ssub.s32 %s20, %s27
      %p29 = scmp.eq.s32.totalorder %s28, 0
      %s31 = sadd.s32 %s30, 1
      %s32 = scalar_select %p29, %s30, %s31
      %p35 = pneg %p29
      %p36 = scmp.eq.s32.totalorder %s20, 1
      %p37 = por %p35, %p36
      %p38 = scmp.ne.s32.totalorder %s30, %s33
      %p39 = scmp.eq.s32.totalorder %s20, 0
      %p40 = por %p38, %p39
      %p41 = scmp.ne.s32.totalorder %s30, %s33
      %p42 = scmp.eq.s32.totalorder %s25, 1
      %p43 = por %p41, %p42
      %p44 = scmp.ne.s32.totalorder %s33, %s34
      %p45 = scmp.eq.s32.totalorder %s25, 0
      %p46 = por %p44, %p45
      %p47 = scmp.ne.s32.totalorder %s33, %s34
      %p48 = scmp.eq.s32.totalorder %s26, 1
      %p49 = por %p47, %p48
      %p51 = scmp.ne.s32.totalorder %s34, %s50
      %p52 = scmp.eq.s32.totalorder %s26, 0
      %p53 = por %p51, %p52
      %s55 = sadd.s32 %s54, 1
      %p58 = scmp.eq.s32.totalorder %s20, 1
      %p59 = scmp.ne.s32.totalorder %s54, %s56
      %p60 = scmp.eq.s32.totalorder %s20, 0
      %p61 = por %p59, %p60
      %p62 = scmp.ne.s32.totalorder %s54, %s56
      %p63 = scmp.eq.s32.totalorder %s25, 1
      %p64 = por %p62, %p63
      %p65 = scmp.ne.s32.totalorder %s56, %s57
      %p66 = scmp.eq.s32.totalorder %s25, 0
      %p67 = por %p65, %p66
      %p68 = scmp.ne.s32.totalorder %s56, %s57
      %p69 = scmp.eq.s32.totalorder %s26, 1
      %p70 = por %p68, %p69
      %p72 = scmp.ne.s32.totalorder %s57, %s71
      %p73 = scmp.eq.s32.totalorder %s26, 0
      %p74 = por %p72, %p73
      %s75 = ssub.s32 %s20, %s27
      %p76 = scmp.eq.s32.totalorder %s75, 0
      %s78 = sadd.s32 %s77, 1
      %s79 = scalar_select %p76, %s77, %s78
      %p82 = pneg %p76
      %p83 = scmp.eq.s32.totalorder %s20, 1
      %p84 = por %p82, %p83
      %p85 = scmp.ne.s32.totalorder %s77, %s80
      %p86 = scmp.eq.s32.totalorder %s20, 0
      %p87 = por %p85, %p86
      %p88 = scmp.ne.s32.totalorder %s77, %s80
      %p89 = scmp.eq.s32.totalorder %s25, 1
      %p90 = por %p88, %p89
      %p91 = scmp.ne.s32.totalorder %s80, %s81
      %p92 = scmp.eq.s32.totalorder %s25, 0
      %p93 = por %p91, %p92
      %p94 = scmp.ne.s32.totalorder %s80, %s81
      %p95 = scmp.eq.s32.totalorder %s26, 1
      %p96 = por %p94, %p95
      %p98 = scmp.ne.s32.totalorder %s81, %s97
      %p99 = scmp.eq.s32.totalorder %s26, 0
      %p100 = por %p98, %p99
      %s101 = ssub.s32 %s20, %s27
      %p102 = scmp.eq.s32.totalorder %s101, 0
      %s104 = sadd.s32 %s103, 1
      %s105 = scalar_select %p102, %s103, %s104
      %p108 = pneg %p102
      %p109 = scmp.eq.s32.totalorder %s20, 1
      %p110 = por %p108, %p109
      %p111 = scmp.ne.s32.totalorder %s103, %s106
      %p112 = scmp.eq.s32.totalorder %s20, 0
      %p113 = por %p111, %p112
      %p114 = scmp.ne.s32.totalorder %s103, %s106
      %p115 = scmp.eq.s32.totalorder %s25, 1
      %p116 = por %p114, %p115
      %p117 = scmp.ne.s32.totalorder %s106, %s107
      %p118 = scmp.eq.s32.totalorder %s25, 0
      %p119 = por %p117, %p118
      %p120 = scmp.ne.s32.totalorder %s106, %s107
      %p121 = scmp.eq.s32.totalorder %s26, 1
      %p122 = por %p120, %p121
      %p124 = scmp.ne.s32.totalorder %s107, %s123
      %p125 = scmp.eq.s32.totalorder %s26, 0
      %p126 = por %p124, %p125
      %p127 = scmp.le.s32.totalorder 1, %s20
      %p128 = scmp.lt.s32.totalorder %s20, 3
      %p129 = pnand %p127, %p128
      %p130 = pneg %p129
      // Predicated region
      $region9: #{tpu_custom_call.1} parent=5 // pred_check
        _
      $region10: #{tpu_custom_call.1} parent=5 // pred_check_branch
        %132 = sbr.rel (%p129) target = $region12
      $region11: #{tpu_custom_call.1} parent=5 // pred_region
        %s133 = ssub.s32 %s20, 1
        // Predicated region
        $region13: #{tpu_custom_call.1} parent=11 // pred_check
          %p134 = pneg %p67
        $region14: #{tpu_custom_call.1} parent=11 // pred_check_branch
          %136 = sbr.rel (%p134) target = $region16
        $region15: #{tpu_custom_call.1} parent=11 // pred_region
          %138 = vsyncadd [#allocation6], 0
          %s139 = sshll.u32 %s1, 4
          %s140 = int_to_ptr.hbm [resolvable:$true] %s139
          %s141 = sshll.u32 [#allocation5], 4
          %s142 = int_to_ptr.vmem [resolvable:$true] %s141
          %147 = dma.hbm_to_vmem [thread:$0]  %s140, 512, %s142, [#allocation6], 128, 128, 8
        $region16: #{tpu_custom_call.1} parent=11 // pred_fallthru
          _
      $region12: #{tpu_custom_call.1} parent=5 // pred_fallthru
        _
      %p148 = scmp.lt.s32.totalorder %s20, 2
      // Predicated region
      $region17: #{tpu_custom_call.1} parent=5 // pred_check
        %p149 = pneg %p148
      $region18: #{tpu_custom_call.1} parent=5 // pred_check_branch
        %151 = sbr.rel (%p149) target = $region20
      $region19: #{tpu_custom_call.1} parent=5 // pred_region
        // Predicated region
        $region21: #{tpu_custom_call.1} parent=19 // pred_check
          %p152 = pneg %p40
        $region22: #{tpu_custom_call.1} parent=19 // pred_check_branch
          %154 = sbr.rel (%p152) target = $region24
        $region23: #{tpu_custom_call.1} parent=19 // pred_region
          %s155 = sand.u32 %s30, 1
          %s156 = scalar_lea.sflag [#allocation3], %s155
          %s157 = sand.u32 %s30, 1
          %s158 = smul.addr %s157, 8
          %s159 = scalar_lea.vmem [#allocation2], %s158
          %161 = vsyncadd %s156, 0
          %s162 = smul.addr %s20, 8
          %s163 = scalar_lea.hbm %s0, %s162
          %s165 = sshll.u32 %s163, 4
          %s166 = int_to_ptr.hbm [resolvable:$true] %s165
          %s167 = sshll.u32 %s159, 4
          %s168 = int_to_ptr.vmem [resolvable:$true] %s167
          %170 = dma.hbm_to_vmem [thread:$0]  %s166, 128, %s168, %s156
        $region24: #{tpu_custom_call.1} parent=19 // pred_fallthru
          _
      $region20: #{tpu_custom_call.1} parent=5 // pred_fallthru
        _
      %p171 = scmp.le.s32.totalorder 1, %s20
      %p172 = scmp.lt.s32.totalorder %s20, 3
      %p173 = pnand %p171, %p172
      %p174 = pneg %p173
      // Predicated region
      $region25: #{tpu_custom_call.1} parent=5 // pred_check
        _
      $region26: #{tpu_custom_call.1} parent=5 // pred_check_branch
        %176 = sbr.rel (%p173) target = $region28
      $region27: #{tpu_custom_call.1} parent=5 // pred_region
        %s177 = ssub.s32 %s20, 1
        %s178 = sand.u32 %s33, 1
        %s179 = scalar_lea.sflag [#allocation3], %s178
        %s180 = sand.u32 %s33, 1
        %s181 = smul.addr %s180, 8
        %s182 = scalar_lea.vmem [#allocation2], %s181
        // Predicated region
        $region29: #{tpu_custom_call.1} parent=27 // pred_check
          %p183 = pneg %p46
        $region30: #{tpu_custom_call.1} parent=27 // pred_check_branch
          %185 = sbr.rel (%p183) target = $region32
        $region31: #{tpu_custom_call.1} parent=27 // pred_region
          %187 = dma.done %s179, 128
        $region32: #{tpu_custom_call.1} parent=27 // pred_fallthru
          _
        // Predicated region
        $region33: #{tpu_custom_call.1} parent=27 // pred_check
          %p188 = pneg %p67
        $region34: #{tpu_custom_call.1} parent=27 // pred_check_branch
          %190 = sbr.rel (%p188) target = $region36
        $region35: #{tpu_custom_call.1} parent=27 // pred_region
          %192 = dma.done [#allocation6], 512
        $region36: #{tpu_custom_call.1} parent=27 // pred_fallthru
          _
        %s193 = sand.u32 %s33, 1
        %s194 = scalar_lea.sflag [#allocation3], %s193
        %s195 = sand.u32 %s33, 1
        %s196 = smul.addr %s195, 8
        %s197 = scalar_lea.vmem [#allocation2], %s196
        %p198 = pneg %p46
        %p199 = pneg %p43
        %p200 = pneg %p67
        %p201 = pneg %p64
        %p202 = pneg %p93
        %p203 = pneg %p90
        %s204 = sand.u32 %s80, 1
        %s205 = scalar_lea.sflag [#allocation4], %s204
        %s206 = sand.u32 %s80, 1
        %s207 = smul.addr %s206, 8
        %s208 = scalar_lea.vmem [#allocation7], %s207
        %p209 = pneg %p119
        %p210 = pneg %p116
        %s211 = sand.u32 %s106, 1
        %s212 = scalar_lea.sflag [#allocation9], %s211
        %s213 = sand.u32 %s106, 1
        %s214 = smul.addr %s213, 8
        %s215 = scalar_lea.vmem [#allocation8], %s214
        %v216 = vld [vmem:[%s182] sm:$0xff]
        %v217 = vld [vmem:[#allocation5] sm:$0xff]
        %v218 = vld [vmem:[#allocation5 + $0x8] sm:$0xff]
        %v219 = vld [vmem:[#allocation5 + $0x10] sm:$0xff]
        %v220 = vld [vmem:[#allocation5 + $0x18] sm:$0xff]
        %vm221 = vcmask 261120
        %v223 = vsel %vm221, %v216, 0
        %225 = vmatpush.msra.mxu0 0.0
        %226 = vmatpush.msra.mxu0 0.0
        %227 = vmatpush.msra.mxu0 0.0
        %228 = vmatpush.msra.mxu0 0.0
        %229 = vmatpush.msra.mxu0 0.0
        %230 = vmatpush.msra.mxu0 0.0
        %231 = vmatpush.msra.mxu0 0.0
        %232 = vmatpush.msra.mxu0 0.0
        %233 = vmatpush.msra.mxu0 0.0
        %234 = vmatpush.msra.mxu0 0.0
        %235 = vmatpush.msra.mxu0 0.0
        %236 = vmatpush.msra.mxu0 0.0
        %237 = vmatpush.msra.mxu0 %v220
        %238 = vmatpush.msra.mxu0 %v219
        %239 = vmatpush.msra.mxu0 %v218
        %240 = vmatpush.msra.mxu0 %v217
        %241 = vmatmul.f32.gmra.mxu0 %v223
        %v242 = vpop.f32.mrf.mxu0
        %v243 = vadd.f32 0.0, %v242
        %244 = vdwg.mxu0
        %246 = vrot.lane.b32.xlu0 %v243, 96
        %v247 = vpop.permute.xlu0 %246
        %v248 = vsel %vm221, %v243, 0
        %v250 = vsel %vm221, %v247, 0
        %252 = vmatpush.xpose.msra.mxu0 0.0
        %253 = vmatpush.xpose.msra.mxu0 0.0
        %254 = vmatpush.xpose.msra.mxu0 0.0
        %255 = vmatpush.xpose.msra.mxu0 0.0
        %256 = vmatpush.xpose.msra.mxu0 0.0
        %257 = vmatpush.xpose.msra.mxu0 0.0
        %258 = vmatpush.xpose.msra.mxu0 0.0
        %259 = vmatpush.xpose.msra.mxu0 0.0
        %260 = vmatpush.xpose.msra.mxu0 0.0
        %261 = vmatpush.xpose.msra.mxu0 0.0
        %262 = vmatpush.xpose.msra.mxu0 0.0
        %263 = vmatpush.xpose.msra.mxu0 0.0
        %264 = vmatpush.xpose.msra.mxu0 0.0
        %265 = vmatpush.xpose.msra.mxu0 0.0
        %266 = vmatpush.xpose.msra.mxu0 0.0
        %267 = vmatpush.xpose.msra.mxu0 %v250
        %268 = vmatmul.f32.gmra.mxu0 %v248
        %v269 = vpop.f32.mrf.mxu0
        %v270 = vadd.f32 0.0, %v269
        %271 = vdwg.mxu0
        %v272 = vmul.f32 %v270, 0.17677669
        %vm273 = vcmask 64512
        %v274 = vsel %vm273, %v272, -inf
        %275 = vmax.xlane.f32.xlu0 %v274
        %v276 = vpop.xlane.xlu0 %275
        %v277 = vsub.f32 %v272, %v276
        %v278 = vmul.f32 %v277, 1.442695
        %v279 = vpow.pop %v278
        %v280 = vsel %vm273, %v279, 0.0
        %281 = vadd.xlane.f32.xlu0 %v280
        %v282 = vpop.xlane.xlu0 %281
        %v283 = vrcp.pop %v282
        %v284 = vmul.f32 %v279, %v283
        %285 = vrot.lane.b32.xlu0 %v243, 64
        %v286 = vpop.permute.xlu0 %285
        %v289 = vsel %vm273, %v284, 0
        %291 = vmatpush.msra.mxu0 0.0
        %292 = vmatpush.msra.mxu0 0.0
        %293 = vmatpush.msra.mxu0 0.0
        %294 = vmatpush.msra.mxu0 0.0
        %295 = vmatpush.msra.mxu0 0.0
        %296 = vmatpush.msra.mxu0 0.0
        %297 = vmatpush.msra.mxu0 0.0
        %298 = vmatpush.msra.mxu0 0.0
        %299 = vmatpush.msra.mxu0 0.0
        %300 = vmatpush.msra.mxu0 0.0
        %301 = vmatpush.msra.mxu0 0.0
        %302 = vmatpush.msra.mxu0 0.0
        %303 = vmatpush.msra.mxu0 0.0
        %304 = vmatpush.msra.mxu0 0.0
        %305 = vmatpush.msra.mxu0 0.0
        %306 = vmatpush.msra.mxu0 %v286
        %307 = vmatmul.f32.gmra.mxu0 %v289
        %v308 = vpop.f32.mrf.mxu0
        %v309 = vadd.f32 0.0, %v308
        %310 = vdwg.mxu0
        %311 = vst.msk [vmem:[%s208] sm:$0xff] %vm273, %v284
        %312 = vst.msk [vmem:[%s215] sm:$0xff] %vm221, %v309
        %s313 = sand.u32 %s80, 1
        %s314 = scalar_lea.sflag [#allocation4], %s313
        %s315 = sand.u32 %s80, 1
        %s316 = smul.addr %s315, 8
        %s317 = scalar_lea.vmem [#allocation7], %s316
        %s318 = sand.u32 %s106, 1
        %s319 = scalar_lea.sflag [#allocation9], %s318
        %s320 = sand.u32 %s106, 1
        %s321 = smul.addr %s320, 8
        %s322 = scalar_lea.vmem [#allocation8], %s321
        // Predicated region
        $region37: #{tpu_custom_call.1} parent=27 // pred_check
          %p323 = pneg %p90
        $region38: #{tpu_custom_call.1} parent=27 // pred_check_branch
          %325 = sbr.rel (%p323) target = $region40
        $region39: #{tpu_custom_call.1} parent=27 // pred_region
          %327 = vsyncadd %s314, 0
          %s328 = smul.addr %s25, 8
          %s329 = scalar_lea.hbm %s2, %s328
          %s331 = sshll.u32 %s317, 4
          %s332 = int_to_ptr.vmem [resolvable:$true] %s331
          %s333 = sshll.u32 %s329, 4
          %s334 = int_to_ptr.hbm [resolvable:$true] %s333
          %336 = dma.vmem_to_hbm [thread:$0]  %s332, 128, %s334, %s314
        $region40: #{tpu_custom_call.1} parent=27 // pred_fallthru
          _
        // Predicated region
        $region41: #{tpu_custom_call.1} parent=27 // pred_check
          %p337 = pneg %p116
        $region42: #{tpu_custom_call.1} parent=27 // pred_check_branch
          %339 = sbr.rel (%p337) target = $region44
        $region43: #{tpu_custom_call.1} parent=27 // pred_region
          %341 = vsyncadd %s319, 0
          %s342 = smul.addr %s25, 8
          %s343 = scalar_lea.hbm %s3, %s342
          %s345 = sshll.u32 %s322, 4
          %s346 = int_to_ptr.vmem [resolvable:$true] %s345
          %s347 = sshll.u32 %s343, 4
          %s348 = int_to_ptr.hbm [resolvable:$true] %s347
          %350 = dma.vmem_to_hbm [thread:$0]  %s346, 128, %s348, %s319
        $region44: #{tpu_custom_call.1} parent=27 // pred_fallthru
          _
      $region28: #{tpu_custom_call.1} parent=5 // pred_fallthru
        _
      %p351 = scmp.le.s32.totalorder 2, %s20
      // Predicated region
      $region45: #{tpu_custom_call.1} parent=5 // pred_check
        %p352 = pneg %p351
      $region46: #{tpu_custom_call.1} parent=5 // pred_check_branch
        %354 = sbr.rel (%p352) target = $region48
      $region47: #{tpu_custom_call.1} parent=5 // pred_region
        %s355 = ssub.s32 %s20, 2
        // Predicated region
        $region49: #{tpu_custom_call.1} parent=47 // pred_check
          %p356 = pneg %p96
        $region50: #{tpu_custom_call.1} parent=47 // pred_check_branch
          %358 = sbr.rel (%p356) target = $region52
        $region51: #{tpu_custom_call.1} parent=47 // pred_region
          %s359 = sand.u32 %s81, 1
          %s360 = scalar_lea.sflag [#allocation4], %s359
          %s361 = sand.u32 %s81, 1
          %s362 = smul.addr %s361, 8
          %s363 = scalar_lea.vmem [#allocation7], %s362
          %365 = dma.done %s360, 128
        $region52: #{tpu_custom_call.1} parent=47 // pred_fallthru
          _
        // Predicated region
        $region53: #{tpu_custom_call.1} parent=47 // pred_check
          %p366 = pneg %p122
        $region54: #{tpu_custom_call.1} parent=47 // pred_check_branch
          %368 = sbr.rel (%p366) target = $region56
        $region55: #{tpu_custom_call.1} parent=47 // pred_region
          %s369 = sand.u32 %s107, 1
          %s370 = scalar_lea.sflag [#allocation9], %s369
          %s371 = sand.u32 %s107, 1
          %s372 = smul.addr %s371, 8
          %s373 = scalar_lea.vmem [#allocation8], %s372
          %375 = dma.done %s370, 128
        $region56: #{tpu_custom_call.1} parent=47 // pred_fallthru
          _
      $region48: #{tpu_custom_call.1} parent=5 // pred_fallthru
        _
    $region6: #{tpu_custom_call.1} parent=1 // loop_footer
      %s24 = sadd.s32 1, %s20
    $region7: #{tpu_custom_call.1} parent=1 // loop_footer_branch
      %19 = sbr.rel target = $region3
    $region8: #{tpu_custom_call.1} parent=1 // loop_exit
      _
    %376 = vsyncpa [#allocation3], 1
    %s377 = scalar_lea.sflag [#allocation3], 1
    %378 = vsyncpa %s377, 1
    %379 = vsyncpa [#allocation6], 1
    %380 = vsyncpa [#allocation4], 1
    %s381 = scalar_lea.sflag [#allocation4], 1
    %382 = vsyncpa %s381, 1
    %383 = vsyncpa [#allocation9], 1
    %s384 = scalar_lea.sflag [#allocation9], 1
    %385 = vsyncpa %s384, 1

</llo_original>
